<compile_context>
chip_gen: v5e
topology: v5e:2x2
jax: 0.10.0
libtpu: 0.0.40
codegen_flags: <defaults>
</compile_context>

<pallas_src>
import functools

import jax
import jax.numpy as jnp
from jax import lax
from jax.experimental import pallas as pl
from jax.experimental.pallas import tpu as pltpu


def attention_module_pallas(x_nchw, params, *, q_tile=128, compute_dtype=jnp.bfloat16):
    """x_nchw: (B, C, H, W) float32. Returns (B, C, H, W) float32."""
    B, C, H, W = x_nchw.shape
    N = H * W
    x = x_nchw.reshape(B, C, N)                  # free reshape: channels->sublanes, N->lanes

    w1, w2, wq, bq, wk, bk, wv, bv, gamma = params
    Cr = w1.shape[0]
    Cq = wq.shape[0]
    Cqkv = 2 * Cq + C

    # Fuse the three 1x1-conv projections into one MXU matmul; cast weights for the MXU.
    w_qkv = jnp.concatenate([wq, wk, wv], axis=0).astype(compute_dtype)      # (2Cq+C, C)
    b_qkv = jnp.concatenate([bq, bk, bv], axis=0).reshape(Cqkv, 1)           # (2Cq+C, 1) f32
    gamma_s = gamma.reshape(1, 1).astype(jnp.float32)                        # SMEM scalar

    tq = q_tile if N % q_tile == 0 else N        # lane-dense query tile
    n_q = N // tq

    def kernel(x_ref, w1_ref, w2_ref, wqkv_ref, bqkv_ref, gamma_ref,
               o_ref, xs_ref, q_ref, k_ref, v_ref):
        qi = pl.program_id(1)

        # Once per image (query-tile 0): SE channel attention + fused QKV projection.
        @pl.when(qi == 0)
        def _():
            xf = x_ref[0].astype(jnp.float32)                              # (C, N)
            # SEAttention: global avg pool -> fc1 -> ReLU -> fc2 -> sigmoid -> channel scale
            pooled = jnp.mean(xf, axis=1, keepdims=True)                   # (C, 1)
            h = jnp.maximum(
                jnp.dot(w1_ref[...], pooled, preferred_element_type=jnp.float32), 0.0)
            s = jax.nn.sigmoid(
                jnp.dot(w2_ref[...], h, preferred_element_type=jnp.float32))       # (C, 1)
            xs = xf * s                                                    # (C, N)
            xs_ref[...] = xs
            # Fused q/k/v 1x1 convs: one bf16 MXU matmul, f32 accumulation, f32 bias add.
            qkv = jnp.dot(wqkv_ref[...], xs.astype(compute_dtype),
                          preferred_element_type=jnp.float32) + bqkv_ref[...]       # (2Cq+C, N)
            q_ref[...] = qkv[0:Cq].astype(q_ref.dtype)
            k_ref[...] = qkv[Cq:2 * Cq].astype(k_ref.dtype)
            v_ref[...] = qkv[2 * Cq:].astype(v_ref.dtype)

        # ---- per-query-tile spatial self-attention ----
        qstart = pl.multiple_of(qi * tq, tq)
        q_t = q_ref[:, pl.ds(qstart, tq)]                                  # (Cq, tq) bf16
        k = k_ref[...]                                                     # (Cq, N)  bf16
        v = v_ref[...]                                                     # (C,  N)  bf16

        # energy[i, j] = <q[:, i], k[:, j]> : contract the shared channel axis (no k^T).
        energy = lax.dot_general(q_t, k, (((0,), (0,)), ((), ())),
                                 preferred_element_type=jnp.float32)       # (tq, N)
        energy = energy - jnp.max(energy, axis=-1, keepdims=True)
        p = jnp.exp(energy)
        attn = p * pl.reciprocal(jnp.sum(p, axis=-1, keepdims=True), approx=True)

        # out[c, i] = sum_j v[c, j] * attn[i, j] : contract the key axis of both.
        out_t = lax.dot_general(v, attn.astype(v.dtype), (((1,), (1,)), ((), ())),
                                preferred_element_type=jnp.float32)        # (C, tq)

        xs_t = xs_ref[:, pl.ds(qstart, tq)]                                # (C, tq) residual
        o_ref[0] = (gamma_ref[0, 0] * out_t + xs_t).astype(o_ref.dtype)

    out = pl.pallas_call(
        kernel,
        out_shape=jax.ShapeDtypeStruct((B, C, N), x_nchw.dtype),
        grid_spec=pltpu.PrefetchScalarGridSpec(
            num_scalar_prefetch=0,
            grid=(B, n_q),
            in_specs=[
                pl.BlockSpec((1, C, N), lambda b, q: (b, 0, 0)),           # x (one image)
                pl.BlockSpec((Cr, C), lambda b, q: (0, 0)),                # SE fc1
                pl.BlockSpec((C, Cr), lambda b, q: (0, 0)),                # SE fc2
                pl.BlockSpec((Cqkv, C), lambda b, q: (0, 0)),              # fused qkv weight
                pl.BlockSpec((Cqkv, 1), lambda b, q: (0, 0)),              # fused qkv bias
                pl.BlockSpec(memory_space=pltpu.MemorySpace.SMEM),         # gamma scalar
            ],
            out_specs=pl.BlockSpec((1, C, tq), lambda b, q: (b, 0, q)),    # lane-dense blocks
            scratch_shapes=[
                pltpu.VMEM((C, N), jnp.float32),       # xs: SE-scaled input (f32 residual)
                pltpu.VMEM((Cq, N), compute_dtype),    # q
                pltpu.VMEM((Cq, N), compute_dtype),    # k
                pltpu.VMEM((C, N), compute_dtype),     # v
            ],
        ),
        compiler_params=pltpu.CompilerParams(
            dimension_semantics=("parallel", "arbitrary"),
            vmem_limit_bytes=64 * 1024 * 1024,
        ),
    )(x, w1, w2, w_qkv, b_qkv, gamma_s)

    return out.reshape(B, C, H, W)


def attention_module_reference(x_nchw, params):
    """Plain-JAX (f32) reference mirroring the PyTorch forward exactly."""
    w1, w2, wq, bq, wk, bk, wv, bv, gamma = params
    B, C, H, W = x_nchw.shape
    N = H * W
    # SEAttention
    pooled = jnp.mean(x_nchw, axis=(2, 3))                   # (B, C)
    h = jax.nn.relu(pooled @ w1.T)                           # (B, C/r)
    s = jax.nn.sigmoid(h @ w2.T)                             # (B, C)
    xs = x_nchw * s[:, :, None, None]
    # Self_Attn (1x1 convs as matmuls over the channel dim)
    x_ncn = xs.reshape(B, C, N)
    q = jnp.einsum('oc,bcn->bon', wq, x_ncn) + bq.reshape(1, -1, 1)
    k = jnp.einsum('oc,bcn->bon', wk, x_ncn) + bk.reshape(1, -1, 1)
    v = jnp.einsum('oc,bcn->bon', wv, x_ncn) + bv.reshape(1, -1, 1)
    energy = jnp.einsum('bci,bcj->bij', q, k)                # (B, N, N)
    attn = jax.nn.softmax(energy, axis=-1)
    out = jnp.einsum('bcj,bij->bci', v, attn)                # (B, C, N)
    out = out.reshape(B, C, H, W)
    return gamma[0] * out + xs


def make_params(key, C, reduction=8, nc_reduce=8):
    Cr = max(C // reduction, 1)      # SE hidden
    Cq = max(C // nc_reduce, 1)      # query/key channels
    ks = jax.random.split(key, 8)
    w1 = 0.2 * jax.random.normal(ks[0], (Cr, C), jnp.float32)   # SE fc1 (out,in), no bias
    w2 = 0.2 * jax.random.normal(ks[1], (C, Cr), jnp.float32)   # SE fc2 (out,in), no bias
    wq = 0.2 * jax.random.normal(ks[2], (Cq, C), jnp.float32)   # 1x1 conv weights (out,in)
    bq = 0.1 * jax.random.normal(ks[3], (Cq,), jnp.float32)
    wk = 0.2 * jax.random.normal(ks[4], (Cq, C), jnp.float32)
    bk = 0.1 * jax.random.normal(ks[5], (Cq,), jnp.float32)
    wv = 0.2 * jax.random.normal(ks[6], (C, C), jnp.float32)
    bv = 0.1 * jax.random.normal(ks[7], (C,), jnp.float32)
    # torch init is 0.0 (spatial branch no-op); use 0.5 deterministically to exercise the path
    gamma = jnp.full((1,), 0.5, jnp.float32)
    return (w1, w2, wq, bq, wk, bk, wv, bv, gamma)


if __name__ == "__main__":
    B, C, H, W = 2, 16, 16, 16        # N = 256 -> two lane-dense query tiles of 128
    key = jax.random.PRNGKey(0)
    kx, kp = jax.random.split(key)
    x = jax.random.normal(kx, (B, C, H, W), jnp.float32)
    params = make_params(kp, C, reduction=8, nc_reduce=8)

    run = jax.jit(lambda xx: attention_module_pallas(xx, params))
    out = jax.block_until_ready(run(x))
    ref = jax.block_until_ready(attention_module_reference(x, params))

    assert out.shape == (B, C, H, W)
    err = float(jnp.max(jnp.abs(out - ref)))
    # bf16 MXU operands + approximate reciprocal -> compare with a matching tolerance.
    assert jnp.allclose(out, ref, atol=2e-2, rtol=2e-2), f"max abs err = {err}"
    print("KERNEL_OK")
</pallas_src>

<mosaic_0001>
module attributes {stable_mosaic.version = 11 : i64} {
  func.func @kernel(%arg0: i32, %arg1: i32, %arg2: memref<1x16x256xf32, #tpu.memory_space<vmem>>, %arg3: memref<2x16xf32, #tpu.memory_space<vmem>>, %arg4: memref<16x2xf32, #tpu.memory_space<vmem>>, %arg5: memref<20x16xbf16, #tpu.memory_space<vmem>>, %arg6: memref<20x1xf32, #tpu.memory_space<vmem>>, %arg7: memref<1x1xf32, #tpu.memory_space<smem>>, %arg8: memref<1x16x128xf32, #tpu.memory_space<vmem>>, %arg9: memref<16x256xf32, #tpu.memory_space<vmem>>, %arg10: memref<2x256xbf16, #tpu.memory_space<vmem>>, %arg11: memref<2x256xbf16, #tpu.memory_space<vmem>>, %arg12: memref<16x256xbf16, #tpu.memory_space<vmem>>) attributes {dimension_semantics = [#tpu.dimension_semantics<parallel>, #tpu.dimension_semantics<arbitrary>], iteration_bounds = array<i64: 2, 2>, scalar_prefetch = 0 : i64, scratch_operands = 4 : i64, tpu.core_type = #tpu.core_type<tc>, window_params = [{transform_indices = @transform_0, window_bounds = array<i64: 1, 16, 256>}, {pipeline_mode = #tpu.pipeline_mode<synchronous>, transform_indices = @transform_1, window_bounds = array<i64: 2, 16>}, {pipeline_mode = #tpu.pipeline_mode<synchronous>, transform_indices = @transform_2, window_bounds = array<i64: 16, 2>}, {pipeline_mode = #tpu.pipeline_mode<synchronous>, transform_indices = @transform_3, window_bounds = array<i64: 20, 16>}, {pipeline_mode = #tpu.pipeline_mode<synchronous>, transform_indices = @transform_4, window_bounds = array<i64: 20, 1>}, {transform_indices = @transform_5, window_bounds = array<i64: 1, 1>}, {transform_indices = @transform_6, window_bounds = array<i64: 1, 16, 128>}]} {
    %c0_i32 = arith.constant 0 : i32
    %0 = arith.cmpi eq, %arg1, %c0_i32 : i32
    %1 = arith.extui %0 : i1 to i32
    %c0_i32_0 = arith.constant 0 : i32
    %2 = arith.cmpi ne, %1, %c0_i32_0 : i32
    scf.if %2 {
      %c0_14 = arith.constant 0 : index
      %c0_15 = arith.constant 0 : index
      %c0_16 = arith.constant 0 : index
      %31 = vector.load %arg2[%c0_14, %c0_15, %c0_16] : memref<1x16x256xf32, #tpu.memory_space<vmem>>, vector<1x16x256xf32>
      %32 = vector.shape_cast %31 : vector<1x16x256xf32> to vector<16x256xf32>
      %cst_17 = arith.constant dense<0.000000e+00> : vector<16xf32>
      %33 = vector.multi_reduction <add>, %32, %cst_17 [1] : vector<16x256xf32> to vector<16xf32>
      %34 = vector.shape_cast %33 : vector<16xf32> to vector<16x1xf32>
      %cst_18 = arith.constant 2.560000e+02 : f32
      %35 = vector.broadcast %cst_18 : f32 to vector<16x1xf32>
      %36 = arith.divf %34, %35 : vector<16x1xf32>
      %c0_19 = arith.constant 0 : index
      %c0_20 = arith.constant 0 : index
      %37 = vector.load %arg3[%c0_19, %c0_20] : memref<2x16xf32, #tpu.memory_space<vmem>>, vector<2x16xf32>
      %cst_21 = arith.constant dense<0.000000e+00> : vector<2x1xf32>
      %38 = tpu.matmul %37, %36, %cst_21 {dimension_numbers = #tpu.dot_dimension_numbers<[1], [0], [0], [1], [0, 0, 1, 1], [], []>} : vector<2x16xf32>, vector<16x1xf32>, vector<2x1xf32> -> vector<2x1xf32>
      %cst_22 = arith.constant 0.000000e+00 : f32
      %39 = vector.broadcast %cst_22 : f32 to vector<2x1xf32>
      %40 = arith.maximumf %38, %39 : vector<2x1xf32>
      %c0_23 = arith.constant 0 : index
      %c0_24 = arith.constant 0 : index
      %41 = vector.load %arg4[%c0_23, %c0_24] : memref<16x2xf32, #tpu.memory_space<vmem>>, vector<16x2xf32>
      %cst_25 = arith.constant dense<0.000000e+00> : vector<16x1xf32>
      %42 = tpu.matmul %41, %40, %cst_25 {dimension_numbers = #tpu.dot_dimension_numbers<[1], [0], [0], [1], [0, 0, 1, 1], [], []>} : vector<16x2xf32>, vector<2x1xf32>, vector<16x1xf32> -> vector<16x1xf32>
      %43 = arith.negf %42 : vector<16x1xf32>
      %44 = math.exp %43 : vector<16x1xf32>
      %cst_26 = arith.constant 1.000000e+00 : f32
      %45 = vector.broadcast %cst_26 : f32 to vector<16x1xf32>
      %46 = arith.addf %45, %44 : vector<16x1xf32>
      %47 = arith.divf %45, %46 : vector<16x1xf32>
      %48 = vector.broadcast %47 : vector<16x1xf32> to vector<16x256xf32>
      %49 = arith.mulf %32, %48 : vector<16x256xf32>
      %c0_27 = arith.constant 0 : index
      %c0_28 = arith.constant 0 : index
      %50 = vector.load %arg9[%c0_27, %c0_28] : memref<16x256xf32, #tpu.memory_space<vmem>>, vector<16x256xf32>
      tpu.vector_store %arg9[%c0_27, %c0_28], %49 {strides = array<i32>} : memref<16x256xf32, #tpu.memory_space<vmem>>, vector<16x256xf32>,
      %c0_29 = arith.constant 0 : index
      %c0_30 = arith.constant 0 : index
      %51 = vector.load %arg5[%c0_29, %c0_30] : memref<20x16xbf16, #tpu.memory_space<vmem>>, vector<20x16xbf16>
      %52 = arith.truncf %49 : vector<16x256xf32> to vector<16x256xbf16>
      %cst_31 = arith.constant dense<0.000000e+00> : vector<20x256xf32>
      %53 = tpu.matmul %51, %52, %cst_31 {dimension_numbers = #tpu.dot_dimension_numbers<[1], [0], [0], [1], [0, 0, 1, 1], [], []>} : vector<20x16xbf16>, vector<16x256xbf16>, vector<20x256xf32> -> vector<20x256xf32>
      %c0_32 = arith.constant 0 : index
      %c0_33 = arith.constant 0 : index
      %54 = vector.load %arg6[%c0_32, %c0_33] : memref<20x1xf32, #tpu.memory_space<vmem>>, vector<20x1xf32>
      %55 = vector.broadcast %54 : vector<20x1xf32> to vector<20x256xf32>
      %56 = arith.addf %53, %55 : vector<20x256xf32>
      %57 = vector.extract_strided_slice %56 {offsets = [0, 0], sizes = [2, 256], strides = [1, 1]} : vector<20x256xf32> to vector<2x256xf32>
      %58 = arith.truncf %57 : vector<2x256xf32> to vector<2x256xbf16>
      %c0_34 = arith.constant 0 : index
      %c0_35 = arith.constant 0 : index
      %59 = vector.load %arg10[%c0_34, %c0_35] : memref<2x256xbf16, #tpu.memory_space<vmem>>, vector<2x256xbf16>
      tpu.vector_store %arg10[%c0_34, %c0_35], %58 {strides = array<i32>} : memref<2x256xbf16, #tpu.memory_space<vmem>>, vector<2x256xbf16>,
      %60 = vector.extract_strided_slice %56 {offsets = [2, 0], sizes = [2, 256], strides = [1, 1]} : vector<20x256xf32> to vector<2x256xf32>
      %61 = arith.truncf %60 : vector<2x256xf32> to vector<2x256xbf16>
      %c0_36 = arith.constant 0 : index
      %c0_37 = arith.constant 0 : index
      %62 = vector.load %arg11[%c0_36, %c0_37] : memref<2x256xbf16, #tpu.memory_space<vmem>>, vector<2x256xbf16>
      tpu.vector_store %arg11[%c0_36, %c0_37], %61 {strides = array<i32>} : memref<2x256xbf16, #tpu.memory_space<vmem>>, vector<2x256xbf16>,
      %63 = vector.extract_strided_slice %56 {offsets = [4, 0], sizes = [16, 256], strides = [1, 1]} : vector<20x256xf32> to vector<16x256xf32>
      %64 = arith.truncf %63 : vector<16x256xf32> to vector<16x256xbf16>
      %c0_38 = arith.constant 0 : index
      %c0_39 = arith.constant 0 : index
      %65 = vector.load %arg12[%c0_38, %c0_39] : memref<16x256xbf16, #tpu.memory_space<vmem>>, vector<16x256xbf16>
      tpu.vector_store %arg12[%c0_38, %c0_39], %64 {strides = array<i32>} : memref<16x256xbf16, #tpu.memory_space<vmem>>, vector<16x256xbf16>,
    } else {
    }
    %c128_i32 = arith.constant 128 : i32
    %3 = arith.muli %arg1, %c128_i32 : i32
    %4 = tpu.assume_multiple %3, 128 : i32
    %c0 = arith.constant 0 : index
    %5 = arith.index_cast %4 : i32 to index
    %6 = vector.load %arg10[%c0, %5] : memref<2x256xbf16, #tpu.memory_space<vmem>>, vector<2x128xbf16>
    %c0_1 = arith.constant 0 : index
    %c0_2 = arith.constant 0 : index
    %7 = vector.load %arg11[%c0_1, %c0_2] : memref<2x256xbf16, #tpu.memory_space<vmem>>, vector<2x256xbf16>
    %c0_3 = arith.constant 0 : index
    %c0_4 = arith.constant 0 : index
    %8 = vector.load %arg12[%c0_3, %c0_4] : memref<16x256xbf16, #tpu.memory_space<vmem>>, vector<16x256xbf16>
    %cst = arith.constant dense<0.000000e+00> : vector<128x256xf32>
    %9 = tpu.matmul %6, %7, %cst {dimension_numbers = #tpu.dot_dimension_numbers<[0], [0], [1], [1], [0, 1, 1, 1], [], []>} : vector<2x128xbf16>, vector<2x256xbf16>, vector<128x256xf32> -> vector<128x256xf32>
    %cst_5 = arith.constant dense<0xFF800000> : vector<128xf32>
    %10 = vector.multi_reduction <maximumf>, %9, %cst_5 [1] : vector<128x256xf32> to vector<128xf32>
    %11 = vector.shape_cast %10 : vector<128xf32> to vector<128x1xf32>
    %12 = vector.broadcast %11 : vector<128x1xf32> to vector<128x256xf32>
    %13 = arith.subf %9, %12 : vector<128x256xf32>
    %14 = math.exp %13 : vector<128x256xf32>
    %cst_6 = arith.constant dense<0.000000e+00> : vector<128xf32>
    %15 = vector.multi_reduction <add>, %14, %cst_6 [1] : vector<128x256xf32> to vector<128xf32>
    %16 = vector.shape_cast %15 : vector<128xf32> to vector<128x1xf32>
    %17 = tpu.reciprocal %16 {approx = true} : vector<128x1xf32> -> vector<128x1xf32>
    %18 = vector.broadcast %17 : vector<128x1xf32> to vector<128x256xf32>
    %19 = arith.mulf %14, %18 : vector<128x256xf32>
    %20 = arith.truncf %19 : vector<128x256xf32> to vector<128x256xbf16>
    %cst_7 = arith.constant dense<0.000000e+00> : vector<16x128xf32>
    %21 = tpu.matmul %8, %20, %cst_7 {dimension_numbers = #tpu.dot_dimension_numbers<[1], [1], [0], [0], [0, 0, 1, 0], [], []>} : vector<16x256xbf16>, vector<128x256xbf16>, vector<16x128xf32> -> vector<16x128xf32>
    %c0_8 = arith.constant 0 : index
    %22 = arith.index_cast %4 : i32 to index
    %23 = vector.load %arg9[%c0_8, %22] : memref<16x256xf32, #tpu.memory_space<vmem>>, vector<16x128xf32>
    %c0_9 = arith.constant 0 : index
    %c0_10 = arith.constant 0 : index
    %24 = memref.load %arg7[%c0_9, %c0_10] : memref<1x1xf32, #tpu.memory_space<smem>>
    %25 = vector.broadcast %24 : f32 to vector<16x128xf32>
    %26 = arith.mulf %25, %21 : vector<16x128xf32>
    %27 = arith.addf %26, %23 : vector<16x128xf32>
    %c0_11 = arith.constant 0 : index
    %c0_12 = arith.constant 0 : index
    %c0_13 = arith.constant 0 : index
    %28 = vector.load %arg8[%c0_11, %c0_12, %c0_13] : memref<1x16x128xf32, #tpu.memory_space<vmem>>, vector<1x16x128xf32>
    %29 = vector.shape_cast %28 : vector<1x16x128xf32> to vector<16x128xf32>
    %30 = vector.shape_cast %27 : vector<16x128xf32> to vector<1x16x128xf32>
    tpu.vector_store %arg8[%c0_11, %c0_12, %c0_13], %30 {strides = array<i32>} : memref<1x16x128xf32, #tpu.memory_space<vmem>>, vector<1x16x128xf32>,
    return
  }
  func.func @transform_0(%arg0: i32, %arg1: i32) -> (i32, i32, i32) {
    %c0_i32 = arith.constant 0 : i32
    %c0_i32_0 = arith.constant 0 : i32
    %c0_i32_1 = arith.constant 0 : i32
    return %arg0, %c0_i32, %c0_i32_0 : i32, i32, i32
  }
  func.func @transform_1(%arg0: i32, %arg1: i32) -> (i32, i32) {
    %c0_i32 = arith.constant 0 : i32
    %c0_i32_0 = arith.constant 0 : i32
    %c0_i32_1 = arith.constant 0 : i32
    return %c0_i32, %c0_i32_0 : i32, i32
  }
  func.func @transform_2(%arg0: i32, %arg1: i32) -> (i32, i32) {
    %c0_i32 = arith.constant 0 : i32
    %c0_i32_0 = arith.constant 0 : i32
    %c0_i32_1 = arith.constant 0 : i32
    return %c0_i32, %c0_i32_0 : i32, i32
  }
  func.func @transform_3(%arg0: i32, %arg1: i32) -> (i32, i32) {
    %c0_i32 = arith.constant 0 : i32
    %c0_i32_0 = arith.constant 0 : i32
    %c0_i32_1 = arith.constant 0 : i32
    return %c0_i32, %c0_i32_0 : i32, i32
  }
  func.func @transform_4(%arg0: i32, %arg1: i32) -> (i32, i32) {
    %c0_i32 = arith.constant 0 : i32
    %c0_i32_0 = arith.constant 0 : i32
    %c0_i32_1 = arith.constant 0 : i32
    return %c0_i32, %c0_i32_0 : i32, i32
  }
  func.func @transform_5(%arg0: i32, %arg1: i32) -> (i32, i32) {
    %c0_i32 = arith.constant 0 : i32
    %c0_i32_0 = arith.constant 0 : i32
    %c0_i32_1 = arith.constant 0 : i32
    return %c0_i32, %c0_i32_0 : i32, i32
  }
  func.func @transform_6(%arg0: i32, %arg1: i32) -> (i32, i32, i32) {
    %c0_i32 = arith.constant 0 : i32
    %c0_i32_0 = arith.constant 0 : i32
    return %arg0, %c0_i32, %arg1 : i32, i32, i32
  }
}

</mosaic_0001>

<llo_original>
// kernel: _lambda_.1
$region0: #{_lambda_.1}
  #allocation0 [shape = 'u32[]', space=smem, size = 0x4, offset = 0x4, fixed_abs, tag = 'smem constant byte address 0x4 - core index']
  #allocation1 [shape = 'u32[72,128]{1,0:T(1,128)}', space=vmem, size = 0x9000, scoped, tag = 'internal scratch']
  #allocation2 [shape = 'f32[16,256]{1,0:T(8,128)}', space=vmem, size = 0x4000, scoped, tag = 'scratch operand']
  #allocation3 [shape = 'bf16[2,256]{1,0:T(2,128)(2,1)}', space=vmem, size = 0x400, scoped, tag = 'scratch operand']
  #allocation4 [shape = 'bf16[2,256]{1,0:T(2,128)(2,1)}', space=vmem, size = 0x400, scoped, tag = 'scratch operand']
  #allocation5 [shape = 'bf16[16,256]{1,0:T(8,128)(2,1)}', space=vmem, size = 0x2000, scoped, tag = 'scratch operand']
  #allocation6 [shape = 'f32[1,1]{1,0:T(1,128)S(6)}', space=smem, size = 0x200, scoped, tag = 'scoped memory for _lambda_.1']
  %s0 = inlined_call_operand.vmem [shape: f32[2,16,256], index: 0, kind: input, shape index: {}]
  %s1 = inlined_call_operand.vmem [shape: f32[2,16], index: 1, kind: input, shape index: {}]
  %s2 = inlined_call_operand.vmem [shape: f32[16,2], index: 2, kind: input, shape index: {}]
  %s3 = inlined_call_operand.vmem [shape: bf16[20,16], index: 3, kind: input, shape index: {}]
  %s4 = inlined_call_operand.vmem [shape: f32[20,1], index: 4, kind: input, shape index: {}]
  %s5 = inlined_call_operand.<no memory space> [shape: f32[1,1], index: 5, kind: input, shape index: {}]
  %s6 = inlined_call_operand.vmem [shape: f32[2,16,256], index: 6, kind: output, shape index: {}]
  %s7 = sld [smem:[#allocation0]]
  $region95: #{_lambda_.1} parent=0
    _
  %s9 = ssub.s32 1, %s7
  %s10 = scalar_select 0, %s9, %s7
  %11 = sst [smem:[#allocation6]] %s5
  $region1: #{_lambda_.1} parent=0
    #allocation7 [shape = 'u8[16384]{0}', space=vmem, size = 0x4000, scoped, tag = 'output window, operand 0']
    loop: start=0, step=1, limit=6
    $region2: #{_lambda_.1} parent=1 // loop_pre_header
      _
    $region3: #{_lambda_.1} parent=1 // loop_header
      %s13 = sphi 0, %s17
      %p14 = scmp.ge.s32.totalorder %s13, 6
      %s20 = sphi 0, %s32
      %s21 = sphi 0, %s28
      %s22 = sphi 0, %s20
      %s23 = sphi 0, %s21
      %s24 = sphi 0, %s22
      %s25 = sphi 0, %s23
      %s35 = sphi 0, %s37
      %s38 = sphi 0, %s35
      %s39 = sphi 0, %s38
      %s55 = sphi 0, %s39
      %s59 = sphi 0, %s59
      %s61 = sphi 0, %s59
      %s62 = sphi 0, %s61
      %s76 = sphi 0, %s62
      %s80 = sphi 0, %s80
      %s82 = sphi 0, %s80
      %s83 = sphi 0, %s82
      %s97 = sphi 0, %s83
      %s101 = sphi 0, %s101
      %s103 = sphi 0, %s101
      %s104 = sphi 0, %s103
      %s118 = sphi 0, %s104
      %s122 = sphi 0, %s122
      %s124 = sphi 0, %s122
      %s125 = sphi 0, %s124
      %s139 = sphi 0, %s125
      %s143 = sphi 0, %s143
      %s145 = sphi 0, %s143
      %s146 = sphi 0, %s145
      %s160 = sphi 0, %s146
      %s168 = sphi 0, %s170
      %s171 = sphi 0, %s168
      %s172 = sphi 0, %s171
      %s188 = sphi 0, %s172
    $region4: #{_lambda_.1} parent=1 // loop_header_branch
      %16 = sbr.rel (%p14) target = $region8
    $region5: #{_lambda_.1} parent=1 // loop_body
      %s18 = ssub.s32 %s13, 1
      %s19 = ssub.s32 %s13, 2
      %s26 = sadd.s32 1, %s21
      %p27 = scmp.ge.s32.totalorder %s26, 2
      %s28 = scalar_select %p27, 0, %s26
      %s29 = sadd.s32 1, %s20
      %s30 = scalar_select %p27, %s29, %s20
      %p31 = scmp.ge.s32.totalorder %s30, 2
      %s32 = scalar_select %p31, 0, %s30
      %s33 = ssub.s32 %s20, %s32
      %p34 = scmp.eq.s32.totalorder %s33, 0
      %s36 = sadd.s32 %s35, 1
      %s37 = scalar_select %p34, %s35, %s36
      %p40 = pneg %p34
      %p41 = scmp.eq.s32.totalorder %s13, 3
      %p42 = por %p40, %p41
      %p43 = scmp.ne.s32.totalorder %s35, %s38
      %p44 = scmp.eq.s32.totalorder %s13, 0
      %p45 = por %p43, %p44
      %p46 = scmp.ne.s32.totalorder %s35, %s38
      %p47 = scmp.eq.s32.totalorder %s18, 3
      %p48 = por %p46, %p47
      %p49 = scmp.ne.s32.totalorder %s38, %s39
      %p50 = scmp.eq.s32.totalorder %s18, 0
      %p51 = por %p49, %p50
      %p52 = scmp.ne.s32.totalorder %s38, %s39
      %p53 = scmp.eq.s32.totalorder %s19, 3
      %p54 = por %p52, %p53
      %p56 = scmp.ne.s32.totalorder %s39, %s55
      %p57 = scmp.eq.s32.totalorder %s19, 0
      %p58 = por %p56, %p57
      %s60 = sadd.s32 %s59, 1
      %p63 = scmp.eq.s32.totalorder %s13, 3
      %p64 = scmp.ne.s32.totalorder %s59, %s61
      %p65 = scmp.eq.s32.totalorder %s13, 0
      %p66 = por %p64, %p65
      %p67 = scmp.ne.s32.totalorder %s59, %s61
      %p68 = scmp.eq.s32.totalorder %s18, 3
      %p69 = por %p67, %p68
      %p70 = scmp.ne.s32.totalorder %s61, %s62
      %p71 = scmp.eq.s32.totalorder %s18, 0
      %p72 = por %p70, %p71
      %p73 = scmp.ne.s32.totalorder %s61, %s62
      %p74 = scmp.eq.s32.totalorder %s19, 3
      %p75 = por %p73, %p74
      %p77 = scmp.ne.s32.totalorder %s62, %s76
      %p78 = scmp.eq.s32.totalorder %s19, 0
      %p79 = por %p77, %p78
      %s81 = sadd.s32 %s80, 1
      %p84 = scmp.eq.s32.totalorder %s13, 3
      %p85 = scmp.ne.s32.totalorder %s80, %s82
      %p86 = scmp.eq.s32.totalorder %s13, 0
      %p87 = por %p85, %p86
      %p88 = scmp.ne.s32.totalorder %s80, %s82
      %p89 = scmp.eq.s32.totalorder %s18, 3
      %p90 = por %p88, %p89
      %p91 = scmp.ne.s32.totalorder %s82, %s83
      %p92 = scmp.eq.s32.totalorder %s18, 0
      %p93 = por %p91, %p92
      %p94 = scmp.ne.s32.totalorder %s82, %s83
      %p95 = scmp.eq.s32.totalorder %s19, 3
      %p96 = por %p94, %p95
      %p98 = scmp.ne.s32.totalorder %s83, %s97
      %p99 = scmp.eq.s32.totalorder %s19, 0
      %p100 = por %p98, %p99
      %s102 = sadd.s32 %s101, 1
      %p105 = scmp.eq.s32.totalorder %s13, 3
      %p106 = scmp.ne.s32.totalorder %s101, %s103
      %p107 = scmp.eq.s32.totalorder %s13, 0
      %p108 = por %p106, %p107
      %p109 = scmp.ne.s32.totalorder %s101, %s103
      %p110 = scmp.eq.s32.totalorder %s18, 3
      %p111 = por %p109, %p110
      %p112 = scmp.ne.s32.totalorder %s103, %s104
      %p113 = scmp.eq.s32.totalorder %s18, 0
      %p114 = por %p112, %p113
      %p115 = scmp.ne.s32.totalorder %s103, %s104
      %p116 = scmp.eq.s32.totalorder %s19, 3
      %p117 = por %p115, %p116
      %p119 = scmp.ne.s32.totalorder %s104, %s118
      %p120 = scmp.eq.s32.totalorder %s19, 0
      %p121 = por %p119, %p120
      %s123 = sadd.s32 %s122, 1
      %p126 = scmp.eq.s32.totalorder %s13, 3
      %p127 = scmp.ne.s32.totalorder %s122, %s124
      %p128 = scmp.eq.s32.totalorder %s13, 0
      %p129 = por %p127, %p128
      %p130 = scmp.ne.s32.totalorder %s122, %s124
      %p131 = scmp.eq.s32.totalorder %s18, 3
      %p132 = por %p130, %p131
      %p133 = scmp.ne.s32.totalorder %s124, %s125
      %p134 = scmp.eq.s32.totalorder %s18, 0
      %p135 = por %p133, %p134
      %p136 = scmp.ne.s32.totalorder %s124, %s125
      %p137 = scmp.eq.s32.totalorder %s19, 3
      %p138 = por %p136, %p137
      %p140 = scmp.ne.s32.totalorder %s125, %s139
      %p141 = scmp.eq.s32.totalorder %s19, 0
      %p142 = por %p140, %p141
      %s144 = sadd.s32 %s143, 1
      %p147 = scmp.eq.s32.totalorder %s13, 3
      %p148 = scmp.ne.s32.totalorder %s143, %s145
      %p149 = scmp.eq.s32.totalorder %s13, 0
      %p150 = por %p148, %p149
      %p151 = scmp.ne.s32.totalorder %s143, %s145
      %p152 = scmp.eq.s32.totalorder %s18, 3
      %p153 = por %p151, %p152
      %p154 = scmp.ne.s32.totalorder %s145, %s146
      %p155 = scmp.eq.s32.totalorder %s18, 0
      %p156 = por %p154, %p155
      %p157 = scmp.ne.s32.totalorder %s145, %s146
      %p158 = scmp.eq.s32.totalorder %s19, 3
      %p159 = por %p157, %p158
      %p161 = scmp.ne.s32.totalorder %s146, %s160
      %p162 = scmp.eq.s32.totalorder %s19, 0
      %p163 = por %p161, %p162
      %s164 = ssub.s32 %s20, %s32
      %s165 = ssub.s32 %s21, %s28
      %s166 = sor.u32 %s164, %s165
      %p167 = scmp.eq.s32.totalorder %s166, 0
      %s169 = sadd.s32 %s168, 1
      %s170 = scalar_select %p167, %s168, %s169
      %p173 = pneg %p167
      %p174 = scmp.eq.s32.totalorder %s13, 3
      %p175 = por %p173, %p174
      %p176 = scmp.ne.s32.totalorder %s168, %s171
      %p177 = scmp.eq.s32.totalorder %s13, 0
      %p178 = por %p176, %p177
      %p179 = scmp.ne.s32.totalorder %s168, %s171
      %p180 = scmp.eq.s32.totalorder %s18, 3
      %p181 = por %p179, %p180
      %p182 = scmp.ne.s32.totalorder %s171, %s172
      %p183 = scmp.eq.s32.totalorder %s18, 0
      %p184 = por %p182, %p183
      %p185 = scmp.ne.s32.totalorder %s171, %s172
      %p186 = scmp.eq.s32.totalorder %s19, 3
      %p187 = por %p185, %p186
      %p189 = scmp.ne.s32.totalorder %s172, %s188
      %p190 = scmp.eq.s32.totalorder %s19, 0
      %p191 = por %p189, %p190
      %p192 = scmp.le.s32.totalorder 1, %s13
      %p193 = scmp.lt.s32.totalorder %s13, 5
      %p194 = pnand %p192, %p193
      %p195 = pneg %p194
      // Predicated region
      $region9: #{_lambda_.1} parent=5 // pred_check
        _
      $region10: #{_lambda_.1} parent=5 // pred_check_branch
        %197 = sbr.rel (%p194) target = $region12
      $region11: #{_lambda_.1} parent=5 // pred_region
        %s198 = ssub.s32 %s13, 1
        // Predicated region
        $region13: #{_lambda_.1} parent=11 // pred_check
          %p199 = pneg %p72
        $region14: #{_lambda_.1} parent=11 // pred_check_branch
          %201 = sbr.rel (%p199) target = $region16
        $region15: #{_lambda_.1} parent=11 // pred_region
          _
        $region16: #{_lambda_.1} parent=11 // pred_fallthru
          _
        // Predicated region
        $region17: #{_lambda_.1} parent=11 // pred_check
          %p202 = pneg %p93
        $region18: #{_lambda_.1} parent=11 // pred_check_branch
          %204 = sbr.rel (%p202) target = $region20
        $region19: #{_lambda_.1} parent=11 // pred_region
          _
        $region20: #{_lambda_.1} parent=11 // pred_fallthru
          _
        // Predicated region
        $region21: #{_lambda_.1} parent=11 // pred_check
          %p205 = pneg %p114
        $region22: #{_lambda_.1} parent=11 // pred_check_branch
          %207 = sbr.rel (%p205) target = $region24
        $region23: #{_lambda_.1} parent=11 // pred_region
          _
        $region24: #{_lambda_.1} parent=11 // pred_fallthru
          _
        // Predicated region
        $region25: #{_lambda_.1} parent=11 // pred_check
          %p208 = pneg %p135
        $region26: #{_lambda_.1} parent=11 // pred_check_branch
          %210 = sbr.rel (%p208) target = $region28
        $region27: #{_lambda_.1} parent=11 // pred_region
          _
        $region28: #{_lambda_.1} parent=11 // pred_fallthru
          _
        // Predicated region
        $region29: #{_lambda_.1} parent=11 // pred_check
          %p211 = pneg %p156
        $region30: #{_lambda_.1} parent=11 // pred_check_branch
          %213 = sbr.rel (%p211) target = $region32
        $region31: #{_lambda_.1} parent=11 // pred_region
          _
        $region32: #{_lambda_.1} parent=11 // pred_fallthru
          _
      $region12: #{_lambda_.1} parent=5 // pred_fallthru
        _
      %p214 = scmp.lt.s32.totalorder %s13, 4
      // Predicated region
      $region33: #{_lambda_.1} parent=5 // pred_check
        %p215 = pneg %p214
      $region34: #{_lambda_.1} parent=5 // pred_check_branch
        %217 = sbr.rel (%p215) target = $region36
      $region35: #{_lambda_.1} parent=5 // pred_region
        // Predicated region
        $region37: #{_lambda_.1} parent=35 // pred_check
          %p218 = pneg %p45
        $region38: #{_lambda_.1} parent=35 // pred_check_branch
          %220 = sbr.rel (%p218) target = $region40
        $region39: #{_lambda_.1} parent=35 // pred_region
          %p221 = scmp.lt.s32.totalorder %s20, 1
          %s222 = scalar_select %p221, %s20, 1
          %s223 = smul.addr %s222, 4
          %s224 = smul.addr %s223, 8
          %s225 = scalar_lea.vmem %s0, %s224
        $region40: #{_lambda_.1} parent=35 // pred_fallthru
          _
      $region36: #{_lambda_.1} parent=5 // pred_fallthru
        _
      %p226 = scmp.le.s32.totalorder 1, %s13
      %p227 = scmp.lt.s32.totalorder %s13, 5
      %p228 = pnand %p226, %p227
      %p229 = pneg %p228
      // Predicated region
      $region41: #{_lambda_.1} parent=5 // pred_check
        _
      $region42: #{_lambda_.1} parent=5 // pred_check_branch
        %231 = sbr.rel (%p228) target = $region44
      $region43: #{_lambda_.1} parent=5 // pred_region
        %s232 = ssub.s32 %s13, 1
        %p233 = scmp.lt.s32.totalorder %s22, 1
        %s234 = scalar_select %p233, %s22, 1
        %s235 = smul.addr %s234, 4
        %s236 = smul.addr %s235, 8
        %s237 = scalar_lea.vmem %s0, %s236
        %p238 = pneg %p51
        %p239 = pneg %p48
        %p240 = pneg %p72
        %p241 = pneg %p69
        %p242 = pneg %p93
        %p243 = pneg %p90
        %p244 = pneg %p114
        %p245 = pneg %p111
        %p246 = pneg %p135
        %p247 = pneg %p132
        %p248 = pneg %p156
        %p249 = pneg %p153
        %p250 = pneg %p184
        %p251 = pneg %p181
        %s252 = sand.u32 %s171, 1
        %s253 = sand.u32 %s171, 1
        %s254 = smul.addr %s253, 16
        %s255 = scalar_lea.vmem [#allocation7], %s254
        %p256 = scmp.lt.s32.totalorder %s22, 1
        %s257 = scalar_select %p256, %s22, 1
        %s258 = smul.addr %s257, 4
        %s259 = smul.addr %s258, 8
        %s260 = scalar_lea.vmem %s0, %s259
        %p262 = scmp.eq.s32.totalorder %s23, 0
        // Predicated region
        $region45: #{_lambda_.1} parent=43 // pred_check
          %p263 = pneg %p262
        $region46: #{_lambda_.1} parent=43 // pred_check_branch
          %265 = sbr.rel (%p263) target = $region48
        $region47: #{_lambda_.1} parent=43 // pred_region
          %v266 = vld [vmem:[%s260] sm:$0xff]
          %v267 = vld [vmem:[%s260 + $0x8] sm:$0xff]
          %v268 = vld [vmem:[%s260 + $0x10] sm:$0xff]
          %v269 = vld [vmem:[%s260 + $0x18] sm:$0xff]
          %v270 = vadd.f32 %v266, %v267
          %271 = vadd.xlane.f32.xlu0 %v270
          %v272 = vpop.xlane.xlu0 %271
          %v273 = vadd.f32 %v268, %v269
          %274 = vadd.xlane.f32.xlu0 %v273
          %v275 = vpop.xlane.xlu0 %274
          %v276 = vrcp.pop 256.0
          %v277 = vmul.f32 256.0, %v276
          %v278 = vsub.f32 1.0, %v277
          %v279 = vmul.f32 %v276, %v278
          %v280 = vadd.f32 %v276, %v279
          %vm281 = vweird.f32 %v276
          %v282 = vsel %vm281, %v276, %v280
          %v283 = vmul.f32 %v272, %v282
          %v284 = vmul.f32 %v275, %v282
          %v285 = vld [vmem:[%s1] sm:$0x3]
          %vm286 = vcmask 130048
          %v288 = vsel %vm286, %v285, 0
          %290 = vmatpush.msra.mxu0 0.0
          %291 = vmatpush.msra.mxu0 0.0
          %292 = vmatpush.msra.mxu0 0.0
          %293 = vmatpush.msra.mxu0 0.0
          %294 = vmatpush.msra.mxu0 0.0
          %295 = vmatpush.msra.mxu0 0.0
          %296 = vmatpush.msra.mxu0 0.0
          %297 = vmatpush.msra.mxu0 0.0
          %298 = vmatpush.msra.mxu0 0.0
          %299 = vmatpush.msra.mxu0 0.0
          %300 = vmatpush.msra.mxu0 0.0
          %301 = vmatpush.msra.mxu0 0.0
          %302 = vmatpush.msra.mxu0 0.0
          %303 = vmatpush.msra.mxu0 0.0
          %304 = vmatpush.msra.mxu0 %v284
          %305 = vmatpush.msra.mxu0 %v283
          %306 = vmatmul.f32.gmra.mxu0 %v288
          %v307 = vpop.f32.mrf.mxu0
          %v308 = vadd.f32 0.0, %v307
          %309 = vdwg.mxu0
          %v310 = vmax.f32 %v308, 0.0
          %v311 = vld [vmem:[%s2] sm:$0xff]
          %v312 = vld [vmem:[%s2 + $0x8] sm:$0xff]
          %vm313 = vcmask 15360
          %v315 = vsel %vm313, %v311, 0
          %v318 = vsel %vm313, %v312, 0
          %vm320 = vcmask 1041408
          %v322 = vsel %vm320, %v310, 0
          %324 = vmatpush.msra.mxu0 0.0
          %325 = vmatpush.msra.mxu0 0.0
          %326 = vmatpush.msra.mxu0 0.0
          %327 = vmatpush.msra.mxu0 0.0
          %328 = vmatpush.msra.mxu0 0.0
          %329 = vmatpush.msra.mxu0 0.0
          %330 = vmatpush.msra.mxu0 0.0
          %331 = vmatpush.msra.mxu0 0.0
          %332 = vmatpush.msra.mxu0 0.0
          %333 = vmatpush.msra.mxu0 0.0
          %334 = vmatpush.msra.mxu0 0.0
          %335 = vmatpush.msra.mxu0 0.0
          %336 = vmatpush.msra.mxu0 0.0
          %337 = vmatpush.msra.mxu0 0.0
          %338 = vmatpush.msra.mxu0 0.0
          %339 = vmatpush.msra.mxu0 %v322
          %340 = vmatmul.f32.gmra.mxu0 %v315
          %v341 = vpop.f32.mrf.mxu0
          %v342 = vadd.f32 0.0, %v341
          %343 = vmatmul.f32.gmra.mxu0 %v318
          %v344 = vpop.f32.mrf.mxu0
          %v345 = vadd.f32 0.0, %v344
          %346 = vdwg.mxu0
          %v347 = vxor.u32 %v342, 2147483648
          %v348 = vxor.u32 %v345, 2147483648
          %v349 = vmul.f32 %v347, 1.442695
          %v350 = vpow.pop %v349
          %v351 = vmul.f32 %v348, 1.442695
          %v352 = vpow.pop %v351
          %v353 = vadd.f32 %v350, 1.0
          %v354 = vadd.f32 %v352, 1.0
          %v355 = vrcp.pop %v353
          %v356 = vmul.f32 %v353, %v355
          %v357 = vsub.f32 1.0, %v356
          %v358 = vmul.f32 %v355, %v357
          %v359 = vadd.f32 %v355, %v358
          %vm360 = vweird.f32 %v353
          %vm361 = vweird.f32 %v355
          %vm362 = vmor %vm360, %vm361
          %v363 = vsel %vm362, %v355, %v359
          %v364 = vand.u32 2147483647, %v353
          %vm365 = vcmp.eq.f32.partialorder %v364, 8.507059e+37
          %v366 = vand.u32 %v353, 2147483648
          %v367 = vor.u32 1.1754944e-38, %v366
          %v368 = vsel %vm365, %v367, %v363
          %v369 = vmul.f32 1.0, %v368
          %v370 = vrcp.pop %v354
          %v371 = vmul.f32 %v354, %v370
          %v372 = vsub.f32 1.0, %v371
          %v373 = vmul.f32 %v370, %v372
          %v374 = vadd.f32 %v370, %v373
          %vm375 = vweird.f32 %v354
          %vm376 = vweird.f32 %v370
          %vm377 = vmor %vm375, %vm376
          %v378 = vsel %vm377, %v370, %v374
          %v379 = vand.u32 2147483647, %v354
          %vm380 = vcmp.eq.f32.partialorder %v379, 8.507059e+37
          %v381 = vand.u32 %v354, 2147483648
          %v382 = vor.u32 1.1754944e-38, %v381
          %v383 = vsel %vm380, %v382, %v378
          %v384 = vmul.f32 1.0, %v383
          %386 = vset.pattern.permute.xlu0 0
          %387 = vperm.xlu0 %386, %v369
          %v388 = vpop.permute.xlu0 %387
          %391 = vset.pattern.permute.xlu0 0
          %392 = vperm.xlu0 %391, %v384
          %v393 = vpop.permute.xlu0 %392
          %v395 = vmul.f32 %v266, %v388
          %v396 = vmul.f32 %v267, %v388
          %v397 = vmul.f32 %v268, %v393
          %v398 = vmul.f32 %v269, %v393
          %399 = vst [vmem:[#allocation2] sm:$0xff] %v395
          %400 = vst [vmem:[#allocation2 + $0x8] sm:$0xff] %v396
          %401 = vst [vmem:[#allocation2 + $0x10] sm:$0xff] %v397
          %402 = vst [vmem:[#allocation2 + $0x18] sm:$0xff] %v398
          %v403 = vld [vmem:[%s3] sm:$0xf]
          %v404 = vld [vmem:[%s3 + $0x4] sm:$0xf]
          %v405 = vld [vmem:[%s3 + $0x8] sm:$0x3]
          %v406 = vpack.c.bf16 %v397, %v395
          %v407 = vpack.c.bf16 %v398, %v396
          %v408 = vld [vmem:[%s4] sm:$0xff]
          %v409 = vld [vmem:[%s4 + $0x8] sm:$0xff]
          %v410 = vld [vmem:[%s4 + $0x10] sm:$0xf]
          %412 = vset.pattern.permute.xlu0 0
          %413 = vperm.xlu0 %412, %v408
          %v414 = vpop.permute.xlu0 %413
          %417 = vset.pattern.permute.xlu0 0
          %418 = vperm.xlu0 %417, %v409
          %v419 = vpop.permute.xlu0 %418
          %422 = vset.pattern.permute.xlu0 0
          %423 = vperm.xlu0 %422, %v410
          %v424 = vpop.permute.xlu0 %423
          %v429 = vunpack.c.l.b16 %v403
          %v430 = vunpack.c.l.b16 %v404
          %v431 = vunpack.c.l.b16 %v405
          %v432 = vpack.c.b16 %v430, %v429
          %v433 = vpack.c.b16 %v431, %v431
          %v435 = vsel %vm286, %v432, 0
          %v438 = vsel %vm286, %v433, 0
          %440 = vmatpush.bf16.msra.mxu0 0
          %441 = vmatpush.bf16.msra.mxu0 0
          %442 = vmatpush.bf16.msra.mxu0 0
          %443 = vmatpush.bf16.msra.mxu0 0
          %444 = vmatpush.bf16.msra.mxu0 0
          %445 = vmatpush.bf16.msra.mxu0 0
          %446 = vmatpush.bf16.msra.mxu0 0
          %447 = vmatpush.bf16.msra.mxu0 %v406
          %448 = vmatmul.bf16.gmra.mxu0 %v435
          %v449 = vpop.f32.mrf.mxu0
          %v450 = vadd.f32 %v414, %v449
          %v451 = vpop.f32.mrf.mxu0
          %v452 = vadd.f32 %v419, %v451
          %453 = vmatmul.bf16.gmra.mxu0 %v438
          %v454 = vpop.f32.mrf.mxu0
          %v455 = vadd.f32 %v424, %v454
          %v456 = vpop.f32.mrf.mxu0
          %457 = vdwg.mxu0
          %458 = vmatpush.bf16.msra.mxu0 0
          %459 = vmatpush.bf16.msra.mxu0 0
          %460 = vmatpush.bf16.msra.mxu0 0
          %461 = vmatpush.bf16.msra.mxu0 0
          %462 = vmatpush.bf16.msra.mxu0 0
          %463 = vmatpush.bf16.msra.mxu0 0
          %464 = vmatpush.bf16.msra.mxu0 0
          %465 = vmatpush.bf16.msra.mxu0 %v407
          %466 = vmatmul.bf16.gmra.mxu0 %v435
          %v467 = vpop.f32.mrf.mxu0
          %v468 = vadd.f32 %v414, %v467
          %v469 = vpop.f32.mrf.mxu0
          %v470 = vadd.f32 %v419, %v469
          %471 = vmatmul.bf16.gmra.mxu0 %v438
          %v472 = vpop.f32.mrf.mxu0
          %v473 = vadd.f32 %v424, %v472
          %v474 = vpop.f32.mrf.mxu0
          %475 = vdwg.mxu0
          %v476 = vpack.c.bf16 %v468, %v450
          %v478 = vrot.slane %v476, 3
          %vm479 = vcmask 1040384
          %v482 = vsel %vm479, %v476, %v478
          %484 = vst [vmem:[#allocation3] sm:$0x3] %v482
          %485 = vst [vmem:[#allocation1] sm:$0xff] %v476
          %s486 = scalar_lea.vmem [#allocation1], 1
          %v487 = vld [vmem:[%s486] ss:$4 sm:$0xff]
          %489 = vst [vmem:[#allocation4] sm:$0x3] %v487
          %v490 = vpack.c.bf16 %v470, %v452
          %v491 = vpack.c.bf16 %v473, %v455
          %vm494 = vcmask 1041408
          %vm495 = vcmask 1045508
          %vm496 = vmor %vm494, %vm495
          %v497 = vrot.slane %v476, 6
          %v498 = vrot.slane %v497, 4
          %v499 = vrot.slane %v490, 6
          %v500 = vsel %vm496, %v498, %v499
          %v501 = vrot.slane %v499, 4
          %v502 = vrot.slane %v491, 6
          %v503 = vsel %vm496, %v501, %v502
          %506 = vst [vmem:[#allocation5] sm:$0xff] %v500
          %507 = vst [vmem:[#allocation5 + $0x8] sm:$0xff] %v503
        $region48: #{_lambda_.1} parent=43 // pred_fallthru
          _
        %s508 = smul.u32 %s23, 128
        %s509 = sshra.s32 %s508, 7
        %s510 = sand.u32 %s508, 127
        %s511 = scalar_lea.vmem [#allocation3], %s509
        %v512 = vld [vmem:[%s511] sm:$0x1]
        %v513 = vld [vmem:[#allocation4] sm:$0x3]
        %v514 = vld [vmem:[#allocation5] sm:$0xff]
        %v515 = vld [vmem:[#allocation5 + $0x8] sm:$0xff]
        %516 = vxpose.xlu0.c.b16.start [1/8] %v512, 128
        %517 = vxpose.xlu0.c.b16.cont [2/8] 0, 128
        %518 = vxpose.xlu0.c.b16.cont [3/8] 0, 128
        %519 = vxpose.xlu0.c.b16.cont [4/8] 0, 128
        %520 = vxpose.xlu0.c.b16.cont [5/8] 0, 128
        %521 = vxpose.xlu0.c.b16.cont [6/8] 0, 128
        %522 = vxpose.xlu0.c.b16.cont [7/8] 0, 128
        %523 = vxpose.xlu0.c.b16.end [8/8] 0, 128
        %v524 = vpop.trf.xlu0
        %v525 = vpop.trf.xlu0
        %v526 = vpop.trf.xlu0
        %v527 = vpop.trf.xlu0
        %v528 = vpop.trf.xlu0
        %v529 = vpop.trf.xlu0
        %v530 = vpop.trf.xlu0
        %v531 = vpop.trf.xlu0
        %533 = vst [vmem:[#allocation1] ss:$9 sm:$0xff] %v513
        %v534 = vld [vmem:[#allocation1] sm:$0xff]
        %v535 = vld [vmem:[#allocation1 + $0x9] sm:$0xff]
        %vm536 = vcmask 15360
        %v538 = vsel %vm536, %v524, 0
        %v541 = vsel %vm536, %v525, 0
        %v544 = vsel %vm536, %v526, 0
        %v547 = vsel %vm536, %v527, 0
        %v550 = vsel %vm536, %v528, 0
        %v553 = vsel %vm536, %v529, 0
        %v556 = vsel %vm536, %v530, 0
        %v559 = vsel %vm536, %v531, 0
        %vm561 = vcmask 1040384
        %v562 = vsel %vm561, %v534, 0
        %v564 = vsel %vm561, %v535, 0
        %566 = vmatpush.bf16.msra.mxu0 0
        %567 = vmatpush.bf16.msra.mxu0 0
        %568 = vmatpush.bf16.msra.mxu0 0
        %569 = vmatpush.bf16.msra.mxu0 0
        %570 = vmatpush.bf16.msra.mxu0 0
        %571 = vmatpush.bf16.msra.mxu0 0
        %572 = vmatpush.bf16.msra.mxu0 0
        %573 = vmatpush.bf16.msra.mxu0 %v562
        %574 = vmatmul.bf16.gmra.mxu0 %v538
        %v575 = vpop.f32.mrf.mxu0
        %v576 = vadd.f32 0.0, %v575
        %v577 = vpop.f32.mrf.mxu0
        %v578 = vadd.f32 0.0, %v577
        %579 = vmatmul.bf16.gmra.mxu0 %v541
        %v580 = vpop.f32.mrf.mxu0
        %v581 = vadd.f32 0.0, %v580
        %v582 = vpop.f32.mrf.mxu0
        %v583 = vadd.f32 0.0, %v582
        %584 = vmatmul.bf16.gmra.mxu0 %v544
        %v585 = vpop.f32.mrf.mxu0
        %v586 = vadd.f32 0.0, %v585
        %v587 = vpop.f32.mrf.mxu0
        %v588 = vadd.f32 0.0, %v587
        %589 = vmatmul.bf16.gmra.mxu0 %v547
        %v590 = vpop.f32.mrf.mxu0
        %v591 = vadd.f32 0.0, %v590
        %v592 = vpop.f32.mrf.mxu0
        %v593 = vadd.f32 0.0, %v592
        %594 = vmatmul.bf16.gmra.mxu0 %v550
        %v595 = vpop.f32.mrf.mxu0
        %v596 = vadd.f32 0.0, %v595
        %v597 = vpop.f32.mrf.mxu0
        %v598 = vadd.f32 0.0, %v597
        %599 = vmatmul.bf16.gmra.mxu0 %v553
        %v600 = vpop.f32.mrf.mxu0
        %v601 = vadd.f32 0.0, %v600
        %v602 = vpop.f32.mrf.mxu0
        %v603 = vadd.f32 0.0, %v602
        %604 = vmatmul.bf16.gmra.mxu0 %v556
        %v605 = vpop.f32.mrf.mxu0
        %v606 = vadd.f32 0.0, %v605
        %v607 = vpop.f32.mrf.mxu0
        %v608 = vadd.f32 0.0, %v607
        %609 = vmatmul.bf16.gmra.mxu0 %v559
        %v610 = vpop.f32.mrf.mxu0
        %v611 = vadd.f32 0.0, %v610
        %v612 = vpop.f32.mrf.mxu0
        %v613 = vadd.f32 0.0, %v612
        %614 = vdwg.mxu0
        %615 = vmatpush.bf16.msra.mxu0 0
        %616 = vmatpush.bf16.msra.mxu0 0
        %617 = vmatpush.bf16.msra.mxu0 0
        %618 = vmatpush.bf16.msra.mxu0 0
        %619 = vmatpush.bf16.msra.mxu0 0
        %620 = vmatpush.bf16.msra.mxu0 0
        %621 = vmatpush.bf16.msra.mxu0 0
        %622 = vmatpush.bf16.msra.mxu0 %v564
        %623 = vmatmul.bf16.gmra.mxu0 %v538
        %v624 = vpop.f32.mrf.mxu0
        %v625 = vadd.f32 0.0, %v624
        %v626 = vpop.f32.mrf.mxu0
        %v627 = vadd.f32 0.0, %v626
        %628 = vmatmul.bf16.gmra.mxu0 %v541
        %v629 = vpop.f32.mrf.mxu0
        %v630 = vadd.f32 0.0, %v629
        %v631 = vpop.f32.mrf.mxu0
        %v632 = vadd.f32 0.0, %v631
        %633 = vmatmul.bf16.gmra.mxu0 %v544
        %v634 = vpop.f32.mrf.mxu0
        %v635 = vadd.f32 0.0, %v634
        %v636 = vpop.f32.mrf.mxu0
        %v637 = vadd.f32 0.0, %v636
        %638 = vmatmul.bf16.gmra.mxu0 %v547
        %v639 = vpop.f32.mrf.mxu0
        %v640 = vadd.f32 0.0, %v639
        %v641 = vpop.f32.mrf.mxu0
        %v642 = vadd.f32 0.0, %v641
        %643 = vmatmul.bf16.gmra.mxu0 %v550
        %v644 = vpop.f32.mrf.mxu0
        %v645 = vadd.f32 0.0, %v644
        %v646 = vpop.f32.mrf.mxu0
        %v647 = vadd.f32 0.0, %v646
        %648 = vmatmul.bf16.gmra.mxu0 %v553
        %v649 = vpop.f32.mrf.mxu0
        %v650 = vadd.f32 0.0, %v649
        %v651 = vpop.f32.mrf.mxu0
        %v652 = vadd.f32 0.0, %v651
        %653 = vmatmul.bf16.gmra.mxu0 %v556
        %v654 = vpop.f32.mrf.mxu0
        %v655 = vadd.f32 0.0, %v654
        %v656 = vpop.f32.mrf.mxu0
        %v657 = vadd.f32 0.0, %v656
        %658 = vmatmul.bf16.gmra.mxu0 %v559
        %v659 = vpop.f32.mrf.mxu0
        %v660 = vadd.f32 0.0, %v659
        %v661 = vpop.f32.mrf.mxu0
        %v662 = vadd.f32 0.0, %v661
        %663 = vdwg.mxu0
        %v664 = vmax.f32 %v576, %v625
        %665 = vmax.xlane.f32.xlu0 %v664
        %v666 = vpop.xlane.xlu0 %665
        %v667 = vmax.f32 %v578, %v627
        %668 = vmax.xlane.f32.xlu0 %v667
        %v669 = vpop.xlane.xlu0 %668
        %v670 = vmax.f32 %v581, %v630
        %671 = vmax.xlane.f32.xlu0 %v670
        %v672 = vpop.xlane.xlu0 %671
        %v673 = vmax.f32 %v583, %v632
        %674 = vmax.xlane.f32.xlu0 %v673
        %v675 = vpop.xlane.xlu0 %674
        %v676 = vmax.f32 %v586, %v635
        %677 = vmax.xlane.f32.xlu0 %v676
        %v678 = vpop.xlane.xlu0 %677
        %v679 = vmax.f32 %v588, %v637
        %680 = vmax.xlane.f32.xlu0 %v679
        %v681 = vpop.xlane.xlu0 %680
        %v682 = vmax.f32 %v591, %v640
        %683 = vmax.xlane.f32.xlu0 %v682
        %v684 = vpop.xlane.xlu0 %683
        %v685 = vmax.f32 %v593, %v642
        %686 = vmax.xlane.f32.xlu0 %v685
        %v687 = vpop.xlane.xlu0 %686
        %v688 = vmax.f32 %v596, %v645
        %689 = vmax.xlane.f32.xlu0 %v688
        %v690 = vpop.xlane.xlu0 %689
        %v691 = vmax.f32 %v598, %v647
        %692 = vmax.xlane.f32.xlu0 %v691
        %v693 = vpop.xlane.xlu0 %692
        %v694 = vmax.f32 %v601, %v650
        %695 = vmax.xlane.f32.xlu0 %v694
        %v696 = vpop.xlane.xlu0 %695
        %v697 = vmax.f32 %v603, %v652
        %698 = vmax.xlane.f32.xlu0 %v697
        %v699 = vpop.xlane.xlu0 %698
        %v700 = vmax.f32 %v606, %v655
        %701 = vmax.xlane.f32.xlu0 %v700
        %v702 = vpop.xlane.xlu0 %701
        %v703 = vmax.f32 %v608, %v657
        %704 = vmax.xlane.f32.xlu0 %v703
        %v705 = vpop.xlane.xlu0 %704
        %v706 = vmax.f32 %v611, %v660
        %707 = vmax.xlane.f32.xlu0 %v706
        %v708 = vpop.xlane.xlu0 %707
        %v709 = vmax.f32 %v613, %v662
        %710 = vmax.xlane.f32.xlu0 %v709
        %v711 = vpop.xlane.xlu0 %710
        %v712 = vsub.f32 %v576, %v666
        %v713 = vsub.f32 %v625, %v666
        %v714 = vsub.f32 %v578, %v669
        %v715 = vsub.f32 %v627, %v669
        %v716 = vsub.f32 %v581, %v672
        %v717 = vsub.f32 %v630, %v672
        %v718 = vsub.f32 %v583, %v675
        %v719 = vsub.f32 %v632, %v675
        %v720 = vsub.f32 %v586, %v678
        %v721 = vsub.f32 %v635, %v678
        %v722 = vsub.f32 %v588, %v681
        %v723 = vsub.f32 %v637, %v681
        %v724 = vsub.f32 %v591, %v684
        %v725 = vsub.f32 %v640, %v684
        %v726 = vsub.f32 %v593, %v687
        %v727 = vsub.f32 %v642, %v687
        %v728 = vsub.f32 %v596, %v690
        %v729 = vsub.f32 %v645, %v690
        %v730 = vsub.f32 %v598, %v693
        %v731 = vsub.f32 %v647, %v693
        %v732 = vsub.f32 %v601, %v696
        %v733 = vsub.f32 %v650, %v696
        %v734 = vsub.f32 %v603, %v699
        %v735 = vsub.f32 %v652, %v699
        %v736 = vsub.f32 %v606, %v702
        %v737 = vsub.f32 %v655, %v702
        %v738 = vsub.f32 %v608, %v705
        %v739 = vsub.f32 %v657, %v705
        %v740 = vsub.f32 %v611, %v708
        %v741 = vsub.f32 %v660, %v708
        %v742 = vsub.f32 %v613, %v711
        %v743 = vsub.f32 %v662, %v711
        %v744 = vmul.f32 %v712, 1.442695
        %v745 = vpow.pop %v744
        %v746 = vmul.f32 %v713, 1.442695
        %v747 = vpow.pop %v746
        %v748 = vmul.f32 %v714, 1.442695
        %v749 = vpow.pop %v748
        %v750 = vmul.f32 %v715, 1.442695
        %v751 = vpow.pop %v750
        %v752 = vmul.f32 %v716, 1.442695
        %v753 = vpow.pop %v752
        %v754 = vmul.f32 %v717, 1.442695
        %v755 = vpow.pop %v754
        %v756 = vmul.f32 %v718, 1.442695
        %v757 = vpow.pop %v756
        %v758 = vmul.f32 %v719, 1.442695
        %v759 = vpow.pop %v758
        %v760 = vmul.f32 %v720, 1.442695
        %v761 = vpow.pop %v760
        %v762 = vmul.f32 %v721, 1.442695
        %v763 = vpow.pop %v762
        %v764 = vmul.f32 %v722, 1.442695
        %v765 = vpow.pop %v764
        %v766 = vmul.f32 %v723, 1.442695
        %v767 = vpow.pop %v766
        %v768 = vmul.f32 %v724, 1.442695
        %v769 = vpow.pop %v768
        %v770 = vmul.f32 %v725, 1.442695
        %v771 = vpow.pop %v770
        %v772 = vmul.f32 %v726, 1.442695
        %v773 = vpow.pop %v772
        %v774 = vmul.f32 %v727, 1.442695
        %v775 = vpow.pop %v774
        %v776 = vmul.f32 %v728, 1.442695
        %v777 = vpow.pop %v776
        %v778 = vmul.f32 %v729, 1.442695
        %v779 = vpow.pop %v778
        %v780 = vmul.f32 %v730, 1.442695
        %v781 = vpow.pop %v780
        %v782 = vmul.f32 %v731, 1.442695
        %v783 = vpow.pop %v782
        %v784 = vmul.f32 %v732, 1.442695
        %v785 = vpow.pop %v784
        %v786 = vmul.f32 %v733, 1.442695
        %v787 = vpow.pop %v786
        %v788 = vmul.f32 %v734, 1.442695
        %v789 = vpow.pop %v788
        %v790 = vmul.f32 %v735, 1.442695
        %v791 = vpow.pop %v790
        %v792 = vmul.f32 %v736, 1.442695
        %v793 = vpow.pop %v792
        %v794 = vmul.f32 %v737, 1.442695
        %v795 = vpow.pop %v794
        %v796 = vmul.f32 %v738, 1.442695
        %v797 = vpow.pop %v796
        %v798 = vmul.f32 %v739, 1.442695
        %v799 = vpow.pop %v798
        %v800 = vmul.f32 %v740, 1.442695
        %v801 = vpow.pop %v800
        %v802 = vmul.f32 %v741, 1.442695
        %v803 = vpow.pop %v802
        %v804 = vmul.f32 %v742, 1.442695
        %v805 = vpow.pop %v804
        %v806 = vmul.f32 %v743, 1.442695
        %v807 = vpow.pop %v806
        %v808 = vadd.f32 %v745, %v747
        %809 = vadd.xlane.f32.xlu0 %v808
        %v810 = vpop.xlane.xlu0 %809
        %v811 = vadd.f32 %v749, %v751
        %812 = vadd.xlane.f32.xlu0 %v811
        %v813 = vpop.xlane.xlu0 %812
        %v814 = vadd.f32 %v753, %v755
        %815 = vadd.xlane.f32.xlu0 %v814
        %v816 = vpop.xlane.xlu0 %815
        %v817 = vadd.f32 %v757, %v759
        %818 = vadd.xlane.f32.xlu0 %v817
        %v819 = vpop.xlane.xlu0 %818
        %v820 = vadd.f32 %v761, %v763
        %821 = vadd.xlane.f32.xlu0 %v820
        %v822 = vpop.xlane.xlu0 %821
        %v823 = vadd.f32 %v765, %v767
        %824 = vadd.xlane.f32.xlu0 %v823
        %v825 = vpop.xlane.xlu0 %824
        %v826 = vadd.f32 %v769, %v771
        %827 = vadd.xlane.f32.xlu0 %v826
        %v828 = vpop.xlane.xlu0 %827
        %v829 = vadd.f32 %v773, %v775
        %830 = vadd.xlane.f32.xlu0 %v829
        %v831 = vpop.xlane.xlu0 %830
        %v832 = vadd.f32 %v777, %v779
        %833 = vadd.xlane.f32.xlu0 %v832
        %v834 = vpop.xlane.xlu0 %833
        %v835 = vadd.f32 %v781, %v783
        %836 = vadd.xlane.f32.xlu0 %v835
        %v837 = vpop.xlane.xlu0 %836
        %v838 = vadd.f32 %v785, %v787
        %839 = vadd.xlane.f32.xlu0 %v838
        %v840 = vpop.xlane.xlu0 %839
        %v841 = vadd.f32 %v789, %v791
        %842 = vadd.xlane.f32.xlu0 %v841
        %v843 = vpop.xlane.xlu0 %842
        %v844 = vadd.f32 %v793, %v795
        %845 = vadd.xlane.f32.xlu0 %v844
        %v846 = vpop.xlane.xlu0 %845
        %v847 = vadd.f32 %v797, %v799
        %848 = vadd.xlane.f32.xlu0 %v847
        %v849 = vpop.xlane.xlu0 %848
        %v850 = vadd.f32 %v801, %v803
        %851 = vadd.xlane.f32.xlu0 %v850
        %v852 = vpop.xlane.xlu0 %851
        %v853 = vadd.f32 %v805, %v807
        %854 = vadd.xlane.f32.xlu0 %v853
        %v855 = vpop.xlane.xlu0 %854
        %v856 = vrcp.pop %v810
        %v857 = vrcp.pop %v813
        %v858 = vrcp.pop %v816
        %v859 = vrcp.pop %v819
        %v860 = vrcp.pop %v822
        %v861 = vrcp.pop %v825
        %v862 = vrcp.pop %v828
        %v863 = vrcp.pop %v831
        %v864 = vrcp.pop %v834
        %v865 = vrcp.pop %v837
        %v866 = vrcp.pop %v840
        %v867 = vrcp.pop %v843
        %v868 = vrcp.pop %v846
        %v869 = vrcp.pop %v849
        %v870 = vrcp.pop %v852
        %v871 = vrcp.pop %v855
        %v872 = vmul.f32 %v745, %v856
        %v873 = vmul.f32 %v747, %v856
        %v874 = vmul.f32 %v749, %v857
        %v875 = vmul.f32 %v751, %v857
        %v876 = vmul.f32 %v753, %v858
        %v877 = vmul.f32 %v755, %v858
        %v878 = vmul.f32 %v757, %v859
        %v879 = vmul.f32 %v759, %v859
        %v880 = vmul.f32 %v761, %v860
        %v881 = vmul.f32 %v763, %v860
        %v882 = vmul.f32 %v765, %v861
        %v883 = vmul.f32 %v767, %v861
        %v884 = vmul.f32 %v769, %v862
        %v885 = vmul.f32 %v771, %v862
        %v886 = vmul.f32 %v773, %v863
        %v887 = vmul.f32 %v775, %v863
        %v888 = vmul.f32 %v777, %v864
        %v889 = vmul.f32 %v779, %v864
        %v890 = vmul.f32 %v781, %v865
        %v891 = vmul.f32 %v783, %v865
        %v892 = vmul.f32 %v785, %v866
        %v893 = vmul.f32 %v787, %v866
        %v894 = vmul.f32 %v789, %v867
        %v895 = vmul.f32 %v791, %v867
        %v896 = vmul.f32 %v793, %v868
        %v897 = vmul.f32 %v795, %v868
        %v898 = vmul.f32 %v797, %v869
        %v899 = vmul.f32 %v799, %v869
        %v900 = vmul.f32 %v801, %v870
        %v901 = vmul.f32 %v803, %v870
        %v902 = vmul.f32 %v805, %v871
        %v903 = vmul.f32 %v807, %v871
        %v904 = vpack.c.bf16 %v874, %v872
        %v905 = vpack.c.bf16 %v875, %v873
        %v906 = vpack.c.bf16 %v878, %v876
        %v907 = vpack.c.bf16 %v879, %v877
        %v908 = vpack.c.bf16 %v882, %v880
        %v909 = vpack.c.bf16 %v883, %v881
        %v910 = vpack.c.bf16 %v886, %v884
        %v911 = vpack.c.bf16 %v887, %v885
        %v912 = vpack.c.bf16 %v890, %v888
        %v913 = vpack.c.bf16 %v891, %v889
        %v914 = vpack.c.bf16 %v894, %v892
        %v915 = vpack.c.bf16 %v895, %v893
        %v916 = vpack.c.bf16 %v898, %v896
        %v917 = vpack.c.bf16 %v899, %v897
        %v918 = vpack.c.bf16 %v902, %v900
        %v919 = vpack.c.bf16 %v903, %v901
        %v922 = vunpack.c.l.b16 %v514
        %v923 = vunpack.c.h.b16 %v514
        %v924 = vunpack.c.l.b16 %v515
        %v925 = vunpack.c.h.b16 %v515
        %v926 = vpack.c.b16 %v924, %v922
        %v927 = vpack.c.b16 %v925, %v923
        %930 = vmatpush.bf16.xpose.msra.mxu0 %v918
        %931 = vmatpush.bf16.xpose.msra.mxu0 %v916
        %932 = vmatpush.bf16.xpose.msra.mxu0 %v914
        %933 = vmatpush.bf16.xpose.msra.mxu0 %v912
        %934 = vmatpush.bf16.xpose.msra.mxu0 %v910
        %935 = vmatpush.bf16.xpose.msra.mxu0 %v908
        %936 = vmatpush.bf16.xpose.msra.mxu0 %v906
        %937 = vmatpush.bf16.xpose.msra.mxu0 %v904
        %938 = vmatmul.bf16.gmra.mxu0 %v926
        %v939 = vpop.f32.mrf.mxu0
        %v940 = vadd.f32 0.0, %v939
        %v941 = vpop.f32.mrf.mxu0
        %v942 = vadd.f32 0.0, %v941
        %943 = vdwg.mxu0
        %944 = vmatpush.bf16.xpose.msra.mxu0 %v919
        %945 = vmatpush.bf16.xpose.msra.mxu0 %v917
        %946 = vmatpush.bf16.xpose.msra.mxu0 %v915
        %947 = vmatpush.bf16.xpose.msra.mxu0 %v913
        %948 = vmatpush.bf16.xpose.msra.mxu0 %v911
        %949 = vmatpush.bf16.xpose.msra.mxu0 %v909
        %950 = vmatpush.bf16.xpose.msra.mxu0 %v907
        %951 = vmatpush.bf16.xpose.msra.mxu0 %v905
        %952 = vmatmul.bf16.gmra.mxu0 %v927
        %v953 = vpop.f32.mrf.mxu0
        %v954 = vadd.f32 %v940, %v953
        %v955 = vpop.f32.mrf.mxu0
        %v956 = vadd.f32 %v942, %v955
        %957 = vdwg.mxu0
        %s958 = smul.addr %s509, 8
        %s959 = scalar_lea.vmem [#allocation2], %s958
        %v960 = vld [vmem:[%s959] sm:$0xff]
        %v961 = vld [vmem:[%s959 + $0x10] sm:$0xff]
        %s962 = sld [smem:[#allocation6]]
        %v963 = vstv %s962
        %v964 = vmul.f32 %v963, %v954
        %v965 = vmul.f32 %v963, %v956
        %v966 = vadd.f32 %v964, %v960
        %v967 = vadd.f32 %v965, %v961
        %968 = vst [vmem:[%s255] sm:$0xff] %v966
        %969 = vst [vmem:[%s255 + $0x8] sm:$0xff] %v967
        %s970 = sand.u32 %s171, 1
        %s971 = sand.u32 %s171, 1
        %s972 = smul.addr %s971, 16
        %s973 = scalar_lea.vmem [#allocation7], %s972
        // Predicated region
        $region49: #{_lambda_.1} parent=43 // pred_check
          %p974 = pneg %p181
        $region50: #{_lambda_.1} parent=43 // pred_check_branch
          %976 = sbr.rel (%p974) target = $region52
        $region51: #{_lambda_.1} parent=43 // pred_region
          %s977 = smul.addr %s22, 4
          %s978 = sadd.s32 %s23, %s977
          %s979 = smul.addr %s978, 8
          %s980 = scalar_lea.vmem %s6, %s979
          // Predicated region
          $region53: #{_lambda_.1} parent=51 // pred_check
            _
          $region54: #{_lambda_.1} parent=51 // pred_check_branch
            %982 = sbr.rel (0) target = $region56
          $region55: #{_lambda_.1} parent=51 // pred_region
            // Predicated region
            $region57: #{_lambda_.1} parent=55 // pred_check
              _
            $region58: #{_lambda_.1} parent=55 // pred_check_branch
              %984 = sbr.rel (0) target = $region60
            $region59: #{_lambda_.1} parent=55 // pred_region
              // Predicated region
              $region72: #{_lambda_.1} parent=59 // pred_check
                _
              $region73: #{_lambda_.1} parent=59 // pred_check_branch
                %1002 = sbr.rel (0) target = $region75
              $region74: #{_lambda_.1} parent=59 // pred_region
                loop: start=0, step=1, limit=1
                $region76: #{_lambda_.1} parent=74 // loop_pre_header
                  _
                $region77: #{_lambda_.1} parent=74 // loop_header
                  %s1004 = sphi 0, %s1008
                  %p1005 = scmp.ge.s32.totalorder %s1004, 1
                  %s1009 = sphi %s973, %s973
                  %s1010 = sphi %s980, %s980
                $region78: #{_lambda_.1} parent=74 // loop_header_branch
                  %1007 = sbr.rel (%p1005) target = $region82
                $region79: #{_lambda_.1} parent=74 // loop_body
                  %v1011 = vld [vmem:[%s1009] sm:$0xff]
                  %1012 = vst [vmem:[%s1010] sm:$0xff] %v1011
                  %v1013 = vld [vmem:[%s1009 + $0x8] sm:$0xff]
                  %1014 = vst [vmem:[%s1010 + $0x10] sm:$0xff] %v1013
                $region80: #{_lambda_.1} parent=74 // loop_footer
                  %s1008 = sadd.s32 1, %s1004
                $region81: #{_lambda_.1} parent=74 // loop_footer_branch
                  %1003 = sbr.rel target = $region77
                $region82: #{_lambda_.1} parent=74 // loop_exit
                  _
              $region75: #{_lambda_.1} parent=59 // pred_fallthru
                _
              // Predicated region
              $region83: #{_lambda_.1} parent=59 // pred_check
                _
              $region84: #{_lambda_.1} parent=59 // pred_check_branch
                %1016 = sbr.rel target = $region86
              $region85: #{_lambda_.1} parent=59 // pred_region
                _
              $region86: #{_lambda_.1} parent=59 // pred_fallthru
                _
            $region60: #{_lambda_.1} parent=55 // pred_fallthru
              _
            // Predicated region
            $region61: #{_lambda_.1} parent=55 // pred_check
              _
            $region62: #{_lambda_.1} parent=55 // pred_check_branch
              %986 = sbr.rel target = $region64
            $region63: #{_lambda_.1} parent=55 // pred_region
              %s988 = ssub.s32 256, 1
              loop: start=0, step=1, limit=1
              $region65: #{_lambda_.1} parent=63 // loop_pre_header
                _
              $region66: #{_lambda_.1} parent=63 // loop_header
                %s990 = sphi 0, %s994
                %p991 = scmp.ge.s32.totalorder %s990, 1
                %s995 = sphi %s973, %s973
                %s996 = sphi %s980, %s980
              $region67: #{_lambda_.1} parent=63 // loop_header_branch
                %993 = sbr.rel (%p991) target = $region71
              $region68: #{_lambda_.1} parent=63 // loop_body
                %v997 = vld [vmem:[%s995] sm:%s988]
                %998 = vst [vmem:[%s996] sm:%s988] %v997
                %v999 = vld [vmem:[%s995 + $0x8] sm:%s988]
                %1000 = vst [vmem:[%s996 + $0x10] sm:%s988] %v999
              $region69: #{_lambda_.1} parent=63 // loop_footer
                %s994 = sadd.s32 1, %s990
              $region70: #{_lambda_.1} parent=63 // loop_footer_branch
                %989 = sbr.rel target = $region66
              $region71: #{_lambda_.1} parent=63 // loop_exit
                _
            $region64: #{_lambda_.1} parent=55 // pred_fallthru
              _
          $region56: #{_lambda_.1} parent=51 // pred_fallthru
            _
          %1017 = vnop
        $region52: #{_lambda_.1} parent=43 // pred_fallthru
          _
      $region44: #{_lambda_.1} parent=5 // pred_fallthru
        _
      %p1018 = scmp.le.s32.totalorder 2, %s13
      // Predicated region
      $region87: #{_lambda_.1} parent=5 // pred_check
        %p1019 = pneg %p1018
      $region88: #{_lambda_.1} parent=5 // pred_check_branch
        %1021 = sbr.rel (%p1019) target = $region90
      $region89: #{_lambda_.1} parent=5 // pred_region
        %s1022 = ssub.s32 %s13, 2
        // Predicated region
        $region91: #{_lambda_.1} parent=89 // pred_check
          %p1023 = pneg %p187
        $region92: #{_lambda_.1} parent=89 // pred_check_branch
          %1025 = sbr.rel (%p1023) target = $region94
        $region93: #{_lambda_.1} parent=89 // pred_region
          %s1026 = sand.u32 %s172, 1
          %s1027 = sand.u32 %s172, 1
          %s1028 = smul.addr %s1027, 16
          %s1029 = scalar_lea.vmem [#allocation7], %s1028
        $region94: #{_lambda_.1} parent=89 // pred_fallthru
          _
      $region90: #{_lambda_.1} parent=5 // pred_fallthru
        _
    $region6: #{_lambda_.1} parent=1 // loop_footer
      %s17 = sadd.s32 1, %s13
    $region7: #{_lambda_.1} parent=1 // loop_footer_branch
      %12 = sbr.rel target = $region3
    $region8: #{_lambda_.1} parent=1 // loop_exit
      _

</llo_original>
